<compile_context>
chip_gen: v5e
topology: v5e:2x2
jax: 0.10.0
libtpu: 0.0.40
codegen_flags: <defaults>
</compile_context>

<pallas_src>
import jax
import jax.numpy as jnp
from jax.experimental import pallas as pl
from jax.experimental.pallas import tpu as pltpu

INPUT_SIZE = 32
HIDDEN_SIZES = [256, 256, 128, 64]
OUTPUT_SIZE = 7
BN_EPS = 1e-5
LEAKY_SLOPE = 0.1

LANE = 128     # TPU lane width; narrow heads are padded up to this for unmasked stores
SUBLANE = 8    # sublane granularity for the batch (second-minor) axis
TM_MAX = 256   # max batch tile: multiple of 256 (v6e/v7x MXU) and of 128 (v5e MXU)


def _leaky_relu(z):
    return jnp.where(z > 0, z, LEAKY_SLOPE * z)


def _property_opt_kernel(
    x_ref, bn_scale_ref, bn_shift_ref,
    wa_ref, ba_ref,
    wf_ref, bf_ref,
    w0_ref, b0_ref,
    w1_ref, b1_ref,
    w2_ref, b2_ref,
    w3_ref, b3_ref,
    w4_ref, b4_ref,
    out_ref, attn_ref,
):
    # Folded BatchNorm1d (inference): x * scale + shift
    h = x_ref[...] * bn_scale_ref[...] + bn_shift_ref[...]

    # Attention head: Linear(32 -> 32, zero-padded to 128 output lanes) + Sigmoid.
    # Padded lanes have weight 0 and bias -1e9 -> sigmoid == 0 there.
    aw_full = jax.nn.sigmoid(
        jnp.dot(h, wa_ref[...], preferred_element_type=jnp.float32) + ba_ref[...]
    )
    attn_ref[...] = aw_full.astype(attn_ref.dtype)        # lane-dense (tm, 128) store
    h = h * aw_full[:, :INPUT_SIZE]                       # gate with the real 32 lanes

    # Feature transform: Linear(32 -> 32) + LeakyReLU(0.1)
    h = _leaky_relu(
        jnp.dot(h, wf_ref[...], preferred_element_type=jnp.float32) + bf_ref[...]
    )

    # Main MLP (dropout = identity in eval mode)
    h = _leaky_relu(
        jnp.dot(h, w0_ref[...], preferred_element_type=jnp.float32) + b0_ref[...]
    )
    h = _leaky_relu(
        jnp.dot(h, w1_ref[...], preferred_element_type=jnp.float32) + b1_ref[...]
    )
    h = _leaky_relu(
        jnp.dot(h, w2_ref[...], preferred_element_type=jnp.float32) + b2_ref[...]
    )
    h = _leaky_relu(
        jnp.dot(h, w3_ref[...], preferred_element_type=jnp.float32) + b3_ref[...]
    )

    # Output head: Linear(64 -> 7, zero-padded to 128 output lanes) -> lane-dense store.
    out = jnp.dot(h, w4_ref[...], preferred_element_type=jnp.float32) + b4_ref[...]
    out_ref[...] = out.astype(out_ref.dtype)


@jax.jit
def property_optimization_forward(x, params):
    """Full forward pass in one Pallas kernel.

    x: (batch, 32) float32. Returns (output (batch, 7), attention_weights (batch, 32)).
    """
    batch = x.shape[0]

    # Adaptive batch tile: round up to a sublane multiple; cap at TM_MAX.
    padded_batch = ((batch + SUBLANE - 1) // SUBLANE) * SUBLANE
    if padded_batch > TM_MAX:
        tm = TM_MAX
        padded_batch = ((batch + TM_MAX - 1) // TM_MAX) * TM_MAX
    else:
        tm = padded_batch
    n_tiles = padded_batch // tm

    x_pad = x if padded_batch == batch else jnp.pad(
        x, ((0, padded_batch - batch), (0, 0)))

    # Fold BatchNorm (inference) into per-feature scale/shift.
    bn_scale = params["bn_gamma"] * jax.lax.rsqrt(params["bn_var"] + BN_EPS)
    bn_shift = params["bn_beta"] - params["bn_mean"] * bn_scale

    # Lane-dense padding of the narrow heads (done once under jit, fused by XLA).
    wa_pad = jnp.zeros((INPUT_SIZE, LANE), jnp.float32).at[:, :INPUT_SIZE].set(params["wa"])
    ba_pad = jnp.full((1, LANE), -1e9, jnp.float32).at[:, :INPUT_SIZE].set(params["ba"])
    w4_pad = jnp.zeros((HIDDEN_SIZES[-1], LANE), jnp.float32).at[:, :OUTPUT_SIZE].set(params["w4"])
    b4_pad = jnp.zeros((1, LANE), jnp.float32).at[:, :OUTPUT_SIZE].set(params["b4"])

    inputs = (
        x_pad, bn_scale, bn_shift,
        wa_pad, ba_pad,
        params["wf"], params["bf"],
        params["w0"], params["b0"],
        params["w1"], params["b1"],
        params["w2"], params["b2"],
        params["w3"], params["b3"],
        w4_pad, b4_pad,
    )

    def resident(p):
        # Same block for every grid step -> weight/bias stays VMEM-resident.
        return pl.BlockSpec(p.shape, lambda i: (0, 0))

    in_specs = [pl.BlockSpec((tm, INPUT_SIZE), lambda i: (i, 0))]
    in_specs += [resident(p) for p in inputs[1:]]
    out_specs = (
        pl.BlockSpec((tm, LANE), lambda i: (i, 0)),
        pl.BlockSpec((tm, LANE), lambda i: (i, 0)),
    )

    per_row_flops = 2 * (
        INPUT_SIZE * LANE                      # attention head (padded)
        + INPUT_SIZE * INPUT_SIZE              # feature transform
        + INPUT_SIZE * HIDDEN_SIZES[0]
        + HIDDEN_SIZES[0] * HIDDEN_SIZES[1]
        + HIDDEN_SIZES[1] * HIDDEN_SIZES[2]
        + HIDDEN_SIZES[2] * HIDDEN_SIZES[3]
        + HIDDEN_SIZES[3] * LANE               # output head (padded)
    )
    weight_bytes = sum(int(p.size) * p.dtype.itemsize for p in inputs[1:])
    cost = pl.CostEstimate(
        flops=int(padded_batch) * per_row_flops,
        transcendentals=int(padded_batch) * LANE,
        bytes_accessed=int(padded_batch) * (INPUT_SIZE + 2 * LANE) * 4 + weight_bytes,
    )

    out_pad, attn_pad = pl.pallas_call(
        _property_opt_kernel,
        out_shape=(
            jax.ShapeDtypeStruct((padded_batch, LANE), jnp.float32),
            jax.ShapeDtypeStruct((padded_batch, LANE), jnp.float32),
        ),
        grid=(n_tiles,),
        in_specs=in_specs,
        out_specs=out_specs,
        compiler_params=pltpu.CompilerParams(dimension_semantics=("parallel",)),
        cost_estimate=cost,
    )(*inputs)

    return out_pad[:batch, :OUTPUT_SIZE], attn_pad[:batch, :INPUT_SIZE]


def init_params(key):
    """Deterministic parameter init mirroring the PyTorch module.

    Linear weights: kaiming_normal_(mode='fan_in', nonlinearity='leaky_relu'),
    biases 0. BatchNorm: gamma=1, beta=0, running_mean=0, running_var=1.
    Weights are stored transposed as (in, out).
    """
    gain = (2.0 / (1.0 + 0.01 ** 2)) ** 0.5

    def linear_w(k, fan_in, fan_out):
        std = gain / (fan_in ** 0.5)
        w = std * jax.random.normal(k, (fan_out, fan_in), dtype=jnp.float32)
        return jnp.transpose(w)

    keys = jax.random.split(key, 8)
    params = {
        "bn_gamma": jnp.ones((1, INPUT_SIZE), jnp.float32),
        "bn_beta": jnp.zeros((1, INPUT_SIZE), jnp.float32),
        "bn_mean": jnp.zeros((1, INPUT_SIZE), jnp.float32),
        "bn_var": jnp.ones((1, INPUT_SIZE), jnp.float32),
        "wa": linear_w(keys[0], INPUT_SIZE, INPUT_SIZE),
        "ba": jnp.zeros((1, INPUT_SIZE), jnp.float32),
        "wf": linear_w(keys[1], INPUT_SIZE, INPUT_SIZE),
        "bf": jnp.zeros((1, INPUT_SIZE), jnp.float32),
    }
    dims = [INPUT_SIZE] + HIDDEN_SIZES + [OUTPUT_SIZE]
    for i in range(len(dims) - 1):
        params[f"w{i}"] = linear_w(keys[2 + i], dims[i], dims[i + 1])
        params[f"b{i}"] = jnp.zeros((1, dims[i + 1]), jnp.float32)
    return params


def reference_forward(x, params):
    """Plain-JAX reference of the same forward pass (sanity check)."""
    h = (x - params["bn_mean"]) * jax.lax.rsqrt(params["bn_var"] + BN_EPS)
    h = h * params["bn_gamma"] + params["bn_beta"]
    aw = jax.nn.sigmoid(h @ params["wa"] + params["ba"])
    h = h * aw
    h = _leaky_relu(h @ params["wf"] + params["bf"])
    for i in range(4):
        h = _leaky_relu(h @ params[f"w{i}"] + params[f"b{i}"])
    out = h @ params["w4"] + params["b4"]
    return out, aw


if __name__ == "__main__":
    key = jax.random.PRNGKey(0)
    k_x, k_p = jax.random.split(key)

    batch = 8
    x = jax.random.normal(k_x, (batch, INPUT_SIZE), dtype=jnp.float32)
    params = init_params(k_p)

    out, attn = property_optimization_forward(x, params)
    out, attn = jax.block_until_ready((out, attn))

    ref_out, ref_attn = reference_forward(x, params)
    assert out.shape == (batch, OUTPUT_SIZE)
    assert attn.shape == (batch, INPUT_SIZE)
    assert jnp.allclose(out, ref_out, atol=1e-4, rtol=1e-4)
    assert jnp.allclose(attn, ref_attn, atol=1e-5, rtol=1e-5)

    # Also exercise a multi-tile batch to cover the grid/pipelining path.
    big = 600
    xb = jax.random.normal(k_x, (big, INPUT_SIZE), dtype=jnp.float32)
    ob, ab = jax.block_until_ready(property_optimization_forward(xb, params))
    rob, rab = reference_forward(xb, params)
    assert jnp.allclose(ob, rob, atol=1e-4, rtol=1e-4)
    assert jnp.allclose(ab, rab, atol=1e-5, rtol=1e-5)

    print("KERNEL_OK")
</pallas_src>

<mosaic_0001>
module attributes {stable_mosaic.version = 11 : i64} {
  func.func @_property_opt_kernel(%arg0: i32, %arg1: memref<8x32xf32, #tpu.memory_space<vmem>>, %arg2: memref<1x32xf32, #tpu.memory_space<vmem>>, %arg3: memref<1x32xf32, #tpu.memory_space<vmem>>, %arg4: memref<32x128xf32, #tpu.memory_space<vmem>>, %arg5: memref<1x128xf32, #tpu.memory_space<vmem>>, %arg6: memref<32x32xf32, #tpu.memory_space<vmem>>, %arg7: memref<1x32xf32, #tpu.memory_space<vmem>>, %arg8: memref<32x256xf32, #tpu.memory_space<vmem>>, %arg9: memref<1x256xf32, #tpu.memory_space<vmem>>, %arg10: memref<256x256xf32, #tpu.memory_space<vmem>>, %arg11: memref<1x256xf32, #tpu.memory_space<vmem>>, %arg12: memref<256x128xf32, #tpu.memory_space<vmem>>, %arg13: memref<1x128xf32, #tpu.memory_space<vmem>>, %arg14: memref<128x64xf32, #tpu.memory_space<vmem>>, %arg15: memref<1x64xf32, #tpu.memory_space<vmem>>, %arg16: memref<64x128xf32, #tpu.memory_space<vmem>>, %arg17: memref<1x128xf32, #tpu.memory_space<vmem>>, %arg18: memref<8x128xf32, #tpu.memory_space<vmem>>, %arg19: memref<8x128xf32, #tpu.memory_space<vmem>>) attributes {dimension_semantics = [#tpu.dimension_semantics<parallel>], iteration_bounds = array<i64: 1>, scalar_prefetch = 0 : i64, scratch_operands = 0 : i64, tpu.core_type = #tpu.core_type<tc>, window_params = [{transform_indices = @transform_0, window_bounds = array<i64: 8, 32>}, {pipeline_mode = #tpu.pipeline_mode<synchronous>, transform_indices = @transform_1, window_bounds = array<i64: 1, 32>}, {pipeline_mode = #tpu.pipeline_mode<synchronous>, transform_indices = @transform_2, window_bounds = array<i64: 1, 32>}, {pipeline_mode = #tpu.pipeline_mode<synchronous>, transform_indices = @transform_3, window_bounds = array<i64: 32, 128>}, {pipeline_mode = #tpu.pipeline_mode<synchronous>, transform_indices = @transform_4, window_bounds = array<i64: 1, 128>}, {pipeline_mode = #tpu.pipeline_mode<synchronous>, transform_indices = @transform_5, window_bounds = array<i64: 32, 32>}, {pipeline_mode = #tpu.pipeline_mode<synchronous>, transform_indices = @transform_6, window_bounds = array<i64: 1, 32>}, {pipeline_mode = #tpu.pipeline_mode<synchronous>, transform_indices = @transform_7, window_bounds = array<i64: 32, 256>}, {pipeline_mode = #tpu.pipeline_mode<synchronous>, transform_indices = @transform_8, window_bounds = array<i64: 1, 256>}, {pipeline_mode = #tpu.pipeline_mode<synchronous>, transform_indices = @transform_9, window_bounds = array<i64: 256, 256>}, {pipeline_mode = #tpu.pipeline_mode<synchronous>, transform_indices = @transform_10, window_bounds = array<i64: 1, 256>}, {pipeline_mode = #tpu.pipeline_mode<synchronous>, transform_indices = @transform_11, window_bounds = array<i64: 256, 128>}, {pipeline_mode = #tpu.pipeline_mode<synchronous>, transform_indices = @transform_12, window_bounds = array<i64: 1, 128>}, {pipeline_mode = #tpu.pipeline_mode<synchronous>, transform_indices = @transform_13, window_bounds = array<i64: 128, 64>}, {pipeline_mode = #tpu.pipeline_mode<synchronous>, transform_indices = @transform_14, window_bounds = array<i64: 1, 64>}, {pipeline_mode = #tpu.pipeline_mode<synchronous>, transform_indices = @transform_15, window_bounds = array<i64: 64, 128>}, {pipeline_mode = #tpu.pipeline_mode<synchronous>, transform_indices = @transform_16, window_bounds = array<i64: 1, 128>}, {transform_indices = @transform_17, window_bounds = array<i64: 8, 128>}, {transform_indices = @transform_18, window_bounds = array<i64: 8, 128>}]} {
    %c0 = arith.constant 0 : index
    %c0_0 = arith.constant 0 : index
    %0 = vector.load %arg1[%c0, %c0_0] : memref<8x32xf32, #tpu.memory_space<vmem>>, vector<8x32xf32>
    %c0_1 = arith.constant 0 : index
    %c0_2 = arith.constant 0 : index
    %1 = vector.load %arg2[%c0_1, %c0_2] : memref<1x32xf32, #tpu.memory_space<vmem>>, vector<1x32xf32>
    %2 = vector.broadcast %1 : vector<1x32xf32> to vector<8x32xf32>
    %3 = arith.mulf %0, %2 : vector<8x32xf32>
    %c0_3 = arith.constant 0 : index
    %c0_4 = arith.constant 0 : index
    %4 = vector.load %arg3[%c0_3, %c0_4] : memref<1x32xf32, #tpu.memory_space<vmem>>, vector<1x32xf32>
    %5 = vector.broadcast %4 : vector<1x32xf32> to vector<8x32xf32>
    %6 = arith.addf %3, %5 : vector<8x32xf32>
    %c0_5 = arith.constant 0 : index
    %c0_6 = arith.constant 0 : index
    %7 = vector.load %arg4[%c0_5, %c0_6] : memref<32x128xf32, #tpu.memory_space<vmem>>, vector<32x128xf32>
    %cst = arith.constant dense<0.000000e+00> : vector<8x128xf32>
    %8 = tpu.matmul %6, %7, %cst {dimension_numbers = #tpu.dot_dimension_numbers<[1], [0], [0], [1], [0, 0, 1, 1], [], []>} : vector<8x32xf32>, vector<32x128xf32>, vector<8x128xf32> -> vector<8x128xf32>
    %c0_7 = arith.constant 0 : index
    %c0_8 = arith.constant 0 : index
    %9 = vector.load %arg5[%c0_7, %c0_8] : memref<1x128xf32, #tpu.memory_space<vmem>>, vector<1x128xf32>
    %10 = vector.broadcast %9 : vector<1x128xf32> to vector<8x128xf32>
    %11 = arith.addf %8, %10 : vector<8x128xf32>
    %12 = arith.negf %11 : vector<8x128xf32>
    %13 = math.exp %12 : vector<8x128xf32>
    %cst_9 = arith.constant 1.000000e+00 : f32
    %14 = vector.broadcast %cst_9 : f32 to vector<8x128xf32>
    %15 = arith.addf %14, %13 : vector<8x128xf32>
    %16 = arith.divf %14, %15 : vector<8x128xf32>
    %c0_10 = arith.constant 0 : index
    %c0_11 = arith.constant 0 : index
    %17 = vector.load %arg19[%c0_10, %c0_11] : memref<8x128xf32, #tpu.memory_space<vmem>>, vector<8x128xf32>
    tpu.vector_store %arg19[%c0_10, %c0_11], %16 {strides = array<i32>} : memref<8x128xf32, #tpu.memory_space<vmem>>, vector<8x128xf32>,
    %18 = vector.extract_strided_slice %16 {offsets = [0, 0], sizes = [8, 32], strides = [1, 1]} : vector<8x128xf32> to vector<8x32xf32>
    %19 = arith.mulf %6, %18 : vector<8x32xf32>
    %c0_12 = arith.constant 0 : index
    %c0_13 = arith.constant 0 : index
    %20 = vector.load %arg6[%c0_12, %c0_13] : memref<32x32xf32, #tpu.memory_space<vmem>>, vector<32x32xf32>
    %cst_14 = arith.constant dense<0.000000e+00> : vector<8x32xf32>
    %21 = tpu.matmul %19, %20, %cst_14 {dimension_numbers = #tpu.dot_dimension_numbers<[1], [0], [0], [1], [0, 0, 1, 1], [], []>} : vector<8x32xf32>, vector<32x32xf32>, vector<8x32xf32> -> vector<8x32xf32>
    %c0_15 = arith.constant 0 : index
    %c0_16 = arith.constant 0 : index
    %22 = vector.load %arg7[%c0_15, %c0_16] : memref<1x32xf32, #tpu.memory_space<vmem>>, vector<1x32xf32>
    %23 = vector.broadcast %22 : vector<1x32xf32> to vector<8x32xf32>
    %24 = arith.addf %21, %23 : vector<8x32xf32>
    %cst_17 = arith.constant 0.000000e+00 : f32
    %25 = vector.broadcast %cst_17 : f32 to vector<8x32xf32>
    %26 = arith.cmpf ogt, %24, %25 : vector<8x32xf32>
    %cst_18 = arith.constant 1.000000e-01 : f32
    %27 = vector.broadcast %cst_18 : f32 to vector<8x32xf32>
    %28 = arith.mulf %27, %24 : vector<8x32xf32>
    %29 = arith.select %26, %24, %28 : vector<8x32xi1>, vector<8x32xf32>
    %c0_19 = arith.constant 0 : index
    %c0_20 = arith.constant 0 : index
    %30 = vector.load %arg8[%c0_19, %c0_20] : memref<32x256xf32, #tpu.memory_space<vmem>>, vector<32x256xf32>
    %cst_21 = arith.constant dense<0.000000e+00> : vector<8x256xf32>
    %31 = tpu.matmul %29, %30, %cst_21 {dimension_numbers = #tpu.dot_dimension_numbers<[1], [0], [0], [1], [0, 0, 1, 1], [], []>} : vector<8x32xf32>, vector<32x256xf32>, vector<8x256xf32> -> vector<8x256xf32>
    %c0_22 = arith.constant 0 : index
    %c0_23 = arith.constant 0 : index
    %32 = vector.load %arg9[%c0_22, %c0_23] : memref<1x256xf32, #tpu.memory_space<vmem>>, vector<1x256xf32>
    %33 = vector.broadcast %32 : vector<1x256xf32> to vector<8x256xf32>
    %34 = arith.addf %31, %33 : vector<8x256xf32>
    %cst_24 = arith.constant 0.000000e+00 : f32
    %35 = vector.broadcast %cst_24 : f32 to vector<8x256xf32>
    %36 = arith.cmpf ogt, %34, %35 : vector<8x256xf32>
    %cst_25 = arith.constant 1.000000e-01 : f32
    %37 = vector.broadcast %cst_25 : f32 to vector<8x256xf32>
    %38 = arith.mulf %37, %34 : vector<8x256xf32>
    %39 = arith.select %36, %34, %38 : vector<8x256xi1>, vector<8x256xf32>
    %c0_26 = arith.constant 0 : index
    %c0_27 = arith.constant 0 : index
    %40 = vector.load %arg10[%c0_26, %c0_27] : memref<256x256xf32, #tpu.memory_space<vmem>>, vector<256x256xf32>
    %cst_28 = arith.constant dense<0.000000e+00> : vector<8x256xf32>
    %41 = tpu.matmul %39, %40, %cst_28 {dimension_numbers = #tpu.dot_dimension_numbers<[1], [0], [0], [1], [0, 0, 1, 1], [], []>} : vector<8x256xf32>, vector<256x256xf32>, vector<8x256xf32> -> vector<8x256xf32>
    %c0_29 = arith.constant 0 : index
    %c0_30 = arith.constant 0 : index
    %42 = vector.load %arg11[%c0_29, %c0_30] : memref<1x256xf32, #tpu.memory_space<vmem>>, vector<1x256xf32>
    %43 = vector.broadcast %42 : vector<1x256xf32> to vector<8x256xf32>
    %44 = arith.addf %41, %43 : vector<8x256xf32>
    %cst_31 = arith.constant 0.000000e+00 : f32
    %45 = vector.broadcast %cst_31 : f32 to vector<8x256xf32>
    %46 = arith.cmpf ogt, %44, %45 : vector<8x256xf32>
    %cst_32 = arith.constant 1.000000e-01 : f32
    %47 = vector.broadcast %cst_32 : f32 to vector<8x256xf32>
    %48 = arith.mulf %47, %44 : vector<8x256xf32>
    %49 = arith.select %46, %44, %48 : vector<8x256xi1>, vector<8x256xf32>
    %c0_33 = arith.constant 0 : index
    %c0_34 = arith.constant 0 : index
    %50 = vector.load %arg12[%c0_33, %c0_34] : memref<256x128xf32, #tpu.memory_space<vmem>>, vector<256x128xf32>
    %cst_35 = arith.constant dense<0.000000e+00> : vector<8x128xf32>
    %51 = tpu.matmul %49, %50, %cst_35 {dimension_numbers = #tpu.dot_dimension_numbers<[1], [0], [0], [1], [0, 0, 1, 1], [], []>} : vector<8x256xf32>, vector<256x128xf32>, vector<8x128xf32> -> vector<8x128xf32>
    %c0_36 = arith.constant 0 : index
    %c0_37 = arith.constant 0 : index
    %52 = vector.load %arg13[%c0_36, %c0_37] : memref<1x128xf32, #tpu.memory_space<vmem>>, vector<1x128xf32>
    %53 = vector.broadcast %52 : vector<1x128xf32> to vector<8x128xf32>
    %54 = arith.addf %51, %53 : vector<8x128xf32>
    %cst_38 = arith.constant 0.000000e+00 : f32
    %55 = vector.broadcast %cst_38 : f32 to vector<8x128xf32>
    %56 = arith.cmpf ogt, %54, %55 : vector<8x128xf32>
    %cst_39 = arith.constant 1.000000e-01 : f32
    %57 = vector.broadcast %cst_39 : f32 to vector<8x128xf32>
    %58 = arith.mulf %57, %54 : vector<8x128xf32>
    %59 = arith.select %56, %54, %58 : vector<8x128xi1>, vector<8x128xf32>
    %c0_40 = arith.constant 0 : index
    %c0_41 = arith.constant 0 : index
    %60 = vector.load %arg14[%c0_40, %c0_41] : memref<128x64xf32, #tpu.memory_space<vmem>>, vector<128x64xf32>
    %cst_42 = arith.constant dense<0.000000e+00> : vector<8x64xf32>
    %61 = tpu.matmul %59, %60, %cst_42 {dimension_numbers = #tpu.dot_dimension_numbers<[1], [0], [0], [1], [0, 0, 1, 1], [], []>} : vector<8x128xf32>, vector<128x64xf32>, vector<8x64xf32> -> vector<8x64xf32>
    %c0_43 = arith.constant 0 : index
    %c0_44 = arith.constant 0 : index
    %62 = vector.load %arg15[%c0_43, %c0_44] : memref<1x64xf32, #tpu.memory_space<vmem>>, vector<1x64xf32>
    %63 = vector.broadcast %62 : vector<1x64xf32> to vector<8x64xf32>
    %64 = arith.addf %61, %63 : vector<8x64xf32>
    %cst_45 = arith.constant 0.000000e+00 : f32
    %65 = vector.broadcast %cst_45 : f32 to vector<8x64xf32>
    %66 = arith.cmpf ogt, %64, %65 : vector<8x64xf32>
    %cst_46 = arith.constant 1.000000e-01 : f32
    %67 = vector.broadcast %cst_46 : f32 to vector<8x64xf32>
    %68 = arith.mulf %67, %64 : vector<8x64xf32>
    %69 = arith.select %66, %64, %68 : vector<8x64xi1>, vector<8x64xf32>
    %c0_47 = arith.constant 0 : index
    %c0_48 = arith.constant 0 : index
    %70 = vector.load %arg16[%c0_47, %c0_48] : memref<64x128xf32, #tpu.memory_space<vmem>>, vector<64x128xf32>
    %cst_49 = arith.constant dense<0.000000e+00> : vector<8x128xf32>
    %71 = tpu.matmul %69, %70, %cst_49 {dimension_numbers = #tpu.dot_dimension_numbers<[1], [0], [0], [1], [0, 0, 1, 1], [], []>} : vector<8x64xf32>, vector<64x128xf32>, vector<8x128xf32> -> vector<8x128xf32>
    %c0_50 = arith.constant 0 : index
    %c0_51 = arith.constant 0 : index
    %72 = vector.load %arg17[%c0_50, %c0_51] : memref<1x128xf32, #tpu.memory_space<vmem>>, vector<1x128xf32>
    %73 = vector.broadcast %72 : vector<1x128xf32> to vector<8x128xf32>
    %74 = arith.addf %71, %73 : vector<8x128xf32>
    %c0_52 = arith.constant 0 : index
    %c0_53 = arith.constant 0 : index
    %75 = vector.load %arg18[%c0_52, %c0_53] : memref<8x128xf32, #tpu.memory_space<vmem>>, vector<8x128xf32>
    tpu.vector_store %arg18[%c0_52, %c0_53], %74 {strides = array<i32>} : memref<8x128xf32, #tpu.memory_space<vmem>>, vector<8x128xf32>,
    return
  }
  func.func @transform_0(%arg0: i32) -> (i32, i32) {
    %c0_i32 = arith.constant 0 : i32
    %c0_i32_0 = arith.constant 0 : i32
    return %arg0, %c0_i32 : i32, i32
  }
  func.func @transform_1(%arg0: i32) -> (i32, i32) {
    %c0_i32 = arith.constant 0 : i32
    %c0_i32_0 = arith.constant 0 : i32
    %c0_i32_1 = arith.constant 0 : i32
    return %c0_i32, %c0_i32_0 : i32, i32
  }
  func.func @transform_2(%arg0: i32) -> (i32, i32) {
    %c0_i32 = arith.constant 0 : i32
    %c0_i32_0 = arith.constant 0 : i32
    %c0_i32_1 = arith.constant 0 : i32
    return %c0_i32, %c0_i32_0 : i32, i32
  }
  func.func @transform_3(%arg0: i32) -> (i32, i32) {
    %c0_i32 = arith.constant 0 : i32
    %c0_i32_0 = arith.constant 0 : i32
    %c0_i32_1 = arith.constant 0 : i32
    return %c0_i32, %c0_i32_0 : i32, i32
  }
  func.func @transform_4(%arg0: i32) -> (i32, i32) {
    %c0_i32 = arith.constant 0 : i32
    %c0_i32_0 = arith.constant 0 : i32
    %c0_i32_1 = arith.constant 0 : i32
    return %c0_i32, %c0_i32_0 : i32, i32
  }
  func.func @transform_5(%arg0: i32) -> (i32, i32) {
    %c0_i32 = arith.constant 0 : i32
    %c0_i32_0 = arith.constant 0 : i32
    %c0_i32_1 = arith.constant 0 : i32
    return %c0_i32, %c0_i32_0 : i32, i32
  }
  func.func @transform_6(%arg0: i32) -> (i32, i32) {
    %c0_i32 = arith.constant 0 : i32
    %c0_i32_0 = arith.constant 0 : i32
    %c0_i32_1 = arith.constant 0 : i32
    return %c0_i32, %c0_i32_0 : i32, i32
  }
  func.func @transform_7(%arg0: i32) -> (i32, i32) {
    %c0_i32 = arith.constant 0 : i32
    %c0_i32_0 = arith.constant 0 : i32
    %c0_i32_1 = arith.constant 0 : i32
    return %c0_i32, %c0_i32_0 : i32, i32
  }
  func.func @transform_8(%arg0: i32) -> (i32, i32) {
    %c0_i32 = arith.constant 0 : i32
    %c0_i32_0 = arith.constant 0 : i32
    %c0_i32_1 = arith.constant 0 : i32
    return %c0_i32, %c0_i32_0 : i32, i32
  }
  func.func @transform_9(%arg0: i32) -> (i32, i32) {
    %c0_i32 = arith.constant 0 : i32
    %c0_i32_0 = arith.constant 0 : i32
    %c0_i32_1 = arith.constant 0 : i32
    return %c0_i32, %c0_i32_0 : i32, i32
  }
  func.func @transform_10(%arg0: i32) -> (i32, i32) {
    %c0_i32 = arith.constant 0 : i32
    %c0_i32_0 = arith.constant 0 : i32
    %c0_i32_1 = arith.constant 0 : i32
    return %c0_i32, %c0_i32_0 : i32, i32
  }
  func.func @transform_11(%arg0: i32) -> (i32, i32) {
    %c0_i32 = arith.constant 0 : i32
    %c0_i32_0 = arith.constant 0 : i32
    %c0_i32_1 = arith.constant 0 : i32
    return %c0_i32, %c0_i32_0 : i32, i32
  }
  func.func @transform_12(%arg0: i32) -> (i32, i32) {
    %c0_i32 = arith.constant 0 : i32
    %c0_i32_0 = arith.constant 0 : i32
    %c0_i32_1 = arith.constant 0 : i32
    return %c0_i32, %c0_i32_0 : i32, i32
  }
  func.func @transform_13(%arg0: i32) -> (i32, i32) {
    %c0_i32 = arith.constant 0 : i32
    %c0_i32_0 = arith.constant 0 : i32
    %c0_i32_1 = arith.constant 0 : i32
    return %c0_i32, %c0_i32_0 : i32, i32
  }
  func.func @transform_14(%arg0: i32) -> (i32, i32) {
    %c0_i32 = arith.constant 0 : i32
    %c0_i32_0 = arith.constant 0 : i32
    %c0_i32_1 = arith.constant 0 : i32
    return %c0_i32, %c0_i32_0 : i32, i32
  }
  func.func @transform_15(%arg0: i32) -> (i32, i32) {
    %c0_i32 = arith.constant 0 : i32
    %c0_i32_0 = arith.constant 0 : i32
    %c0_i32_1 = arith.constant 0 : i32
    return %c0_i32, %c0_i32_0 : i32, i32
  }
  func.func @transform_16(%arg0: i32) -> (i32, i32) {
    %c0_i32 = arith.constant 0 : i32
    %c0_i32_0 = arith.constant 0 : i32
    %c0_i32_1 = arith.constant 0 : i32
    return %c0_i32, %c0_i32_0 : i32, i32
  }
  func.func @transform_17(%arg0: i32) -> (i32, i32) {
    %c0_i32 = arith.constant 0 : i32
    %c0_i32_0 = arith.constant 0 : i32
    return %arg0, %c0_i32 : i32, i32
  }
  func.func @transform_18(%arg0: i32) -> (i32, i32) {
    %c0_i32 = arith.constant 0 : i32
    %c0_i32_0 = arith.constant 0 : i32
    return %arg0, %c0_i32 : i32, i32
  }
}

</mosaic_0001>

<llo_original>
// kernel: property_optimization_forward.1
$region0: #{property_optimization_forward.1}
  #allocation0 [shape = 'u32[]', space=smem, size = 0x4, offset = 0x4, fixed_abs, tag = 'smem constant byte address 0x4 - core index']
  #allocation1 [shape = 'u32[72,128]{1,0:T(1,128)}', space=vmem, size = 0x9000, scoped, tag = 'internal scratch']
  %s0 = inlined_call_operand.vmem [shape: f32[8,32], index: 0, kind: input, shape index: {}]
  %s1 = inlined_call_operand.vmem [shape: f32[1,32], index: 1, kind: input, shape index: {}]
  %s2 = inlined_call_operand.vmem [shape: f32[1,32], index: 2, kind: input, shape index: {}]
  %s3 = inlined_call_operand.vmem [shape: f32[32,128], index: 3, kind: input, shape index: {}]
  %s4 = inlined_call_operand.vmem [shape: f32[1,128], index: 4, kind: input, shape index: {}]
  %s5 = inlined_call_operand.vmem [shape: f32[32,32], index: 5, kind: input, shape index: {}]
  %s6 = inlined_call_operand.vmem [shape: f32[1,32], index: 6, kind: input, shape index: {}]
  %s7 = inlined_call_operand.vmem [shape: f32[32,256], index: 7, kind: input, shape index: {}]
  %s8 = inlined_call_operand.vmem [shape: f32[1,256], index: 8, kind: input, shape index: {}]
  %s9 = inlined_call_operand.vmem [shape: f32[256,256], index: 9, kind: input, shape index: {}]
  %s10 = inlined_call_operand.vmem [shape: f32[1,256], index: 10, kind: input, shape index: {}]
  %s11 = inlined_call_operand.hbm [shape: f32[256,128], index: 11, kind: input, shape index: {}]
  %s12 = inlined_call_operand.vmem [shape: f32[1,128], index: 12, kind: input, shape index: {}]
  %s13 = inlined_call_operand.vmem [shape: f32[128,64], index: 13, kind: input, shape index: {}]
  %s14 = inlined_call_operand.vmem [shape: f32[1,64], index: 14, kind: input, shape index: {}]
  %s15 = inlined_call_operand.vmem [shape: f32[64,128], index: 15, kind: input, shape index: {}]
  %s16 = inlined_call_operand.vmem [shape: f32[1,128], index: 16, kind: input, shape index: {}]
  %s17 = inlined_call_operand.hbm [shape: f32[8,128], index: 17, kind: output, shape index: {0}]
  %s18 = inlined_call_operand.hbm [shape: f32[8,128], index: 18, kind: output, shape index: {1}]
  %19 = xla_tuple %s17, %s18
  %s20 = sld [smem:[#allocation0]]
  $region90: #{property_optimization_forward.1} parent=0
    _
  %s22 = ssub.s32 1, %s20
  %s23 = scalar_select 0, %s22, %s20
  $region1: #{property_optimization_forward.1} parent=0
    #allocation2 [shape = 'u8[131072]{0}', space=vmem, size = 0x20000, scoped, tag = 'input window, operand 11, single buffered']
    #allocation3 [shape = 's32[1]{0}', space=sflag, size = 0x4, scoped, tag = 'scoped memory for property_optimization_forward.1']
    #allocation4 [shape = 's32[1]{0}', space=sflag, size = 0x4, scoped, tag = 'scoped memory for property_optimization_forward.1']
    #allocation5 [shape = 'u8[4096]{0}', space=vmem, size = 0x1000, scoped, tag = 'output window, operand 0, single buffered']
    #allocation6 [shape = 'u8[4096]{0}', space=vmem, size = 0x1000, scoped, tag = 'output window, operand 1, single buffered']
    #allocation7 [shape = 's32[1]{0}', space=sflag, size = 0x4, scoped, tag = 'scoped memory for property_optimization_forward.1']
    %24 = vsyncpa [#allocation3], 0
    %25 = vsyncpa [#allocation4], 0
    %26 = vsyncpa [#allocation7], 0
    // Predicated region
    $region2: #{property_optimization_forward.1} parent=1 // pred_check
      _
    $region3: #{property_optimization_forward.1} parent=1 // pred_check_branch
      %28 = sbr.rel (0) target = $region5
    $region4: #{property_optimization_forward.1} parent=1 // pred_region
      _
    $region5: #{property_optimization_forward.1} parent=1 // pred_fallthru
      _
    // Predicated region
    $region6: #{property_optimization_forward.1} parent=1 // pred_check
      _
    $region7: #{property_optimization_forward.1} parent=1 // pred_check_branch
      %30 = sbr.rel (0) target = $region9
    $region8: #{property_optimization_forward.1} parent=1 // pred_region
      _
    $region9: #{property_optimization_forward.1} parent=1 // pred_fallthru
      _
    // Predicated region
    $region10: #{property_optimization_forward.1} parent=1 // pred_check
      _
    $region11: #{property_optimization_forward.1} parent=1 // pred_check_branch
      %32 = sbr.rel (0) target = $region13
    $region12: #{property_optimization_forward.1} parent=1 // pred_region
      _
    $region13: #{property_optimization_forward.1} parent=1 // pred_fallthru
      _
    // Predicated region
    $region14: #{property_optimization_forward.1} parent=1 // pred_check
      _
    $region15: #{property_optimization_forward.1} parent=1 // pred_check_branch
      %34 = sbr.rel (0) target = $region17
    $region16: #{property_optimization_forward.1} parent=1 // pred_region
      _
    $region17: #{property_optimization_forward.1} parent=1 // pred_fallthru
      _
    // Predicated region
    $region18: #{property_optimization_forward.1} parent=1 // pred_check
      _
    $region19: #{property_optimization_forward.1} parent=1 // pred_check_branch
      %36 = sbr.rel (0) target = $region21
    $region20: #{property_optimization_forward.1} parent=1 // pred_region
      _
    $region21: #{property_optimization_forward.1} parent=1 // pred_fallthru
      _
    // Predicated region
    $region22: #{property_optimization_forward.1} parent=1 // pred_check
      _
    $region23: #{property_optimization_forward.1} parent=1 // pred_check_branch
      %38 = sbr.rel (0) target = $region25
    $region24: #{property_optimization_forward.1} parent=1 // pred_region
      _
    $region25: #{property_optimization_forward.1} parent=1 // pred_fallthru
      _
    // Predicated region
    $region26: #{property_optimization_forward.1} parent=1 // pred_check
      _
    $region27: #{property_optimization_forward.1} parent=1 // pred_check_branch
      %40 = sbr.rel (0) target = $region29
    $region28: #{property_optimization_forward.1} parent=1 // pred_region
      _
    $region29: #{property_optimization_forward.1} parent=1 // pred_fallthru
      _
    // Predicated region
    $region30: #{property_optimization_forward.1} parent=1 // pred_check
      _
    $region31: #{property_optimization_forward.1} parent=1 // pred_check_branch
      %42 = sbr.rel (0) target = $region33
    $region32: #{property_optimization_forward.1} parent=1 // pred_region
      _
    $region33: #{property_optimization_forward.1} parent=1 // pred_fallthru
      _
    // Predicated region
    $region34: #{property_optimization_forward.1} parent=1 // pred_check
      _
    $region35: #{property_optimization_forward.1} parent=1 // pred_check_branch
      %44 = sbr.rel (0) target = $region37
    $region36: #{property_optimization_forward.1} parent=1 // pred_region
      _
    $region37: #{property_optimization_forward.1} parent=1 // pred_fallthru
      _
    // Predicated region
    $region38: #{property_optimization_forward.1} parent=1 // pred_check
      _
    $region39: #{property_optimization_forward.1} parent=1 // pred_check_branch
      %46 = sbr.rel (0) target = $region41
    $region40: #{property_optimization_forward.1} parent=1 // pred_region
      _
    $region41: #{property_optimization_forward.1} parent=1 // pred_fallthru
      _
    // Predicated region
    $region42: #{property_optimization_forward.1} parent=1 // pred_check
      _
    $region43: #{property_optimization_forward.1} parent=1 // pred_check_branch
      %48 = sbr.rel (0) target = $region45
    $region44: #{property_optimization_forward.1} parent=1 // pred_region
      _
    $region45: #{property_optimization_forward.1} parent=1 // pred_fallthru
      _
    // Predicated region
    $region46: #{property_optimization_forward.1} parent=1 // pred_check
      _
    $region47: #{property_optimization_forward.1} parent=1 // pred_check_branch
      %50 = sbr.rel (0) target = $region49
    $region48: #{property_optimization_forward.1} parent=1 // pred_region
      %52 = vsyncadd [#allocation3], 0
      %s53 = sshll.u32 %s11, 4
      %s54 = int_to_ptr.hbm [resolvable:$true] %s53
      %s55 = sshll.u32 [#allocation2], 4
      %s56 = int_to_ptr.vmem [resolvable:$true] %s55
      %61 = dma.hbm_to_vmem [thread:$0]  %s54, 4096, %s56, [#allocation3], 128, 128, 8
    $region49: #{property_optimization_forward.1} parent=1 // pred_fallthru
      _
    // Predicated region
    $region50: #{property_optimization_forward.1} parent=1 // pred_check
      _
    $region51: #{property_optimization_forward.1} parent=1 // pred_check_branch
      %63 = sbr.rel (0) target = $region53
    $region52: #{property_optimization_forward.1} parent=1 // pred_region
      _
    $region53: #{property_optimization_forward.1} parent=1 // pred_fallthru
      _
    // Predicated region
    $region54: #{property_optimization_forward.1} parent=1 // pred_check
      _
    $region55: #{property_optimization_forward.1} parent=1 // pred_check_branch
      %65 = sbr.rel (0) target = $region57
    $region56: #{property_optimization_forward.1} parent=1 // pred_region
      _
    $region57: #{property_optimization_forward.1} parent=1 // pred_fallthru
      _
    // Predicated region
    $region58: #{property_optimization_forward.1} parent=1 // pred_check
      _
    $region59: #{property_optimization_forward.1} parent=1 // pred_check_branch
      %67 = sbr.rel (0) target = $region61
    $region60: #{property_optimization_forward.1} parent=1 // pred_region
      _
    $region61: #{property_optimization_forward.1} parent=1 // pred_fallthru
      _
    // Predicated region
    $region62: #{property_optimization_forward.1} parent=1 // pred_check
      _
    $region63: #{property_optimization_forward.1} parent=1 // pred_check_branch
      %69 = sbr.rel (0) target = $region65
    $region64: #{property_optimization_forward.1} parent=1 // pred_region
      _
    $region65: #{property_optimization_forward.1} parent=1 // pred_fallthru
      _
    // Predicated region
    $region66: #{property_optimization_forward.1} parent=1 // pred_check
      _
    $region67: #{property_optimization_forward.1} parent=1 // pred_check_branch
      %71 = sbr.rel (0) target = $region69
    $region68: #{property_optimization_forward.1} parent=1 // pred_region
      _
    $region69: #{property_optimization_forward.1} parent=1 // pred_fallthru
      _
    // Predicated region
    $region70: #{property_optimization_forward.1} parent=1 // pred_check
      _
    $region71: #{property_optimization_forward.1} parent=1 // pred_check_branch
      %73 = sbr.rel (0) target = $region73
    $region72: #{property_optimization_forward.1} parent=1 // pred_region
      %75 = dma.done [#allocation3], 4096
    $region73: #{property_optimization_forward.1} parent=1 // pred_fallthru
      _
    %v76 = vld [vmem:[%s0] sm:$0xff]
    %v77 = vld [vmem:[%s1] sm:$0x1]
    %v79 = vperm.slane %v77, 0
    %v81 = vmul.f32 %v76, %v79
    %v82 = vld [vmem:[%s2] sm:$0x1]
    %v84 = vperm.slane %v82, 0
    %v86 = vadd.f32 %v81, %v84
    %v87 = vld [vmem:[%s3] sm:$0xff]
    %v88 = vld [vmem:[%s3 + $0x8] sm:$0xff]
    %v89 = vld [vmem:[%s3 + $0x10] sm:$0xff]
    %v90 = vld [vmem:[%s3 + $0x18] sm:$0xff]
    %v91 = vld [vmem:[%s4] sm:$0x1]
    %v93 = vperm.slane %v91, 0
    %vm95 = vcmask 261120
    %v97 = vsel %vm95, %v86, 0
    %99 = vmatpush.msra.mxu0 0.0
    %100 = vmatpush.msra.mxu0 0.0
    %101 = vmatpush.msra.mxu0 0.0
    %102 = vmatpush.msra.mxu0 0.0
    %103 = vmatpush.msra.mxu0 0.0
    %104 = vmatpush.msra.mxu0 0.0
    %105 = vmatpush.msra.mxu0 0.0
    %106 = vmatpush.msra.mxu0 0.0
    %107 = vmatpush.msra.mxu0 0.0
    %108 = vmatpush.msra.mxu0 0.0
    %109 = vmatpush.msra.mxu0 0.0
    %110 = vmatpush.msra.mxu0 0.0
    %111 = vmatpush.msra.mxu0 %v90
    %112 = vmatpush.msra.mxu0 %v89
    %113 = vmatpush.msra.mxu0 %v88
    %114 = vmatpush.msra.mxu0 %v87
    %115 = vmatmul.f32.gmra.mxu0 %v97
    %v116 = vpop.f32.mrf.mxu0
    %v117 = vadd.f32 %v93, %v116
    %118 = vdwg.mxu0
    %v119 = vxor.u32 %v117, 2147483648
    %v120 = vmul.f32 %v119, 1.442695
    %v121 = vpow.pop %v120
    %v122 = vadd.f32 %v121, 1.0
    %v123 = vrcp.pop %v122
    %v124 = vmul.f32 %v122, %v123
    %v125 = vsub.f32 1.0, %v124
    %v126 = vmul.f32 %v123, %v125
    %v127 = vadd.f32 %v123, %v126
    %vm128 = vweird.f32 %v122
    %vm129 = vweird.f32 %v123
    %vm130 = vmor %vm128, %vm129
    %v131 = vsel %vm130, %v123, %v127
    %v132 = vand.u32 2147483647, %v122
    %vm133 = vcmp.eq.f32.partialorder %v132, 8.507059e+37
    %v134 = vand.u32 %v122, 2147483648
    %v135 = vor.u32 1.1754944e-38, %v134
    %v136 = vsel %vm133, %v135, %v131
    %v137 = vmul.f32 1.0, %v136
    %138 = vst [vmem:[#allocation6] sm:$0xff] %v137
    %v139 = vmul.f32 %v86, %v137
    %v140 = vld [vmem:[%s5] sm:$0xff]
    %v141 = vld [vmem:[%s5 + $0x8] sm:$0xff]
    %v142 = vld [vmem:[%s5 + $0x10] sm:$0xff]
    %v143 = vld [vmem:[%s5 + $0x18] sm:$0xff]
    %v144 = vld [vmem:[%s6] sm:$0x1]
    %v146 = vperm.slane %v144, 0
    %v149 = vsel %vm95, %v139, 0
    %151 = vmatpush.msra.mxu0 0.0
    %152 = vmatpush.msra.mxu0 0.0
    %153 = vmatpush.msra.mxu0 0.0
    %154 = vmatpush.msra.mxu0 0.0
    %155 = vmatpush.msra.mxu0 0.0
    %156 = vmatpush.msra.mxu0 0.0
    %157 = vmatpush.msra.mxu0 0.0
    %158 = vmatpush.msra.mxu0 0.0
    %159 = vmatpush.msra.mxu0 0.0
    %160 = vmatpush.msra.mxu0 0.0
    %161 = vmatpush.msra.mxu0 0.0
    %162 = vmatpush.msra.mxu0 0.0
    %163 = vmatpush.msra.mxu0 %v143
    %164 = vmatpush.msra.mxu0 %v142
    %165 = vmatpush.msra.mxu0 %v141
    %166 = vmatpush.msra.mxu0 %v140
    %167 = vmatmul.f32.gmra.mxu0 %v149
    %v168 = vpop.f32.mrf.mxu0
    %v169 = vadd.f32 %v146, %v168
    %170 = vdwg.mxu0
    %vm171 = vcmp.gt.f32.partialorder %v169, 0.0
    %v172 = vmul.f32 %v169, 0.1
    %v173 = vsel %vm171, %v169, %v172
    %v174 = vld [vmem:[%s7] sm:$0xff]
    %v175 = vld [vmem:[%s7 + $0x8] sm:$0xff]
    %v176 = vld [vmem:[%s7 + $0x10] sm:$0xff]
    %v177 = vld [vmem:[%s7 + $0x18] sm:$0xff]
    %v178 = vld [vmem:[%s7 + $0x20] sm:$0xff]
    %v179 = vld [vmem:[%s7 + $0x28] sm:$0xff]
    %v180 = vld [vmem:[%s7 + $0x30] sm:$0xff]
    %v181 = vld [vmem:[%s7 + $0x38] sm:$0xff]
    %v182 = vld [vmem:[%s8] sm:$0x3]
    %v184 = vperm.slane %v182, 0
    %v185 = vperm.slane %v182, 1
    %v189 = vsel %vm95, %v173, 0
    %191 = vmatpush.msra.mxu0 0.0
    %192 = vmatpush.msra.mxu0 0.0
    %193 = vmatpush.msra.mxu0 0.0
    %194 = vmatpush.msra.mxu0 0.0
    %195 = vmatpush.msra.mxu0 0.0
    %196 = vmatpush.msra.mxu0 0.0
    %197 = vmatpush.msra.mxu0 0.0
    %198 = vmatpush.msra.mxu0 0.0
    %199 = vmatpush.msra.mxu0 0.0
    %200 = vmatpush.msra.mxu0 0.0
    %201 = vmatpush.msra.mxu0 0.0
    %202 = vmatpush.msra.mxu0 0.0
    %203 = vmatpush.msra.mxu0 %v180
    %204 = vmatpush.msra.mxu0 %v178
    %205 = vmatpush.msra.mxu0 %v176
    %206 = vmatpush.msra.mxu0 %v174
    %207 = vmatmul.f32.gmra.mxu0 %v189
    %v208 = vpop.f32.mrf.mxu0
    %v209 = vadd.f32 %v184, %v208
    %210 = vdwg.mxu0
    %211 = vmatpush.msra.mxu0 0.0
    %212 = vmatpush.msra.mxu0 0.0
    %213 = vmatpush.msra.mxu0 0.0
    %214 = vmatpush.msra.mxu0 0.0
    %215 = vmatpush.msra.mxu0 0.0
    %216 = vmatpush.msra.mxu0 0.0
    %217 = vmatpush.msra.mxu0 0.0
    %218 = vmatpush.msra.mxu0 0.0
    %219 = vmatpush.msra.mxu0 0.0
    %220 = vmatpush.msra.mxu0 0.0
    %221 = vmatpush.msra.mxu0 0.0
    %222 = vmatpush.msra.mxu0 0.0
    %223 = vmatpush.msra.mxu0 %v181
    %224 = vmatpush.msra.mxu0 %v179
    %225 = vmatpush.msra.mxu0 %v177
    %226 = vmatpush.msra.mxu0 %v175
    %227 = vmatmul.f32.gmra.mxu0 %v189
    %v228 = vpop.f32.mrf.mxu0
    %v229 = vadd.f32 %v185, %v228
    %230 = vdwg.mxu0
    %vm231 = vcmp.gt.f32.partialorder %v209, 0.0
    %vm232 = vcmp.gt.f32.partialorder %v229, 0.0
    %v233 = vmul.f32 %v209, 0.1
    %v234 = vmul.f32 %v229, 0.1
    %v235 = vsel %vm231, %v209, %v233
    %v236 = vsel %vm232, %v229, %v234
    %v237 = vld [vmem:[%s9] sm:$0xff]
    %v238 = vld [vmem:[%s9 + $0x8] sm:$0xff]
    %v239 = vld [vmem:[%s9 + $0x10] sm:$0xff]
    %v240 = vld [vmem:[%s9 + $0x18] sm:$0xff]
    %v241 = vld [vmem:[%s9 + $0x20] sm:$0xff]
    %v242 = vld [vmem:[%s9 + $0x28] sm:$0xff]
    %v243 = vld [vmem:[%s9 + $0x30] sm:$0xff]
    %v244 = vld [vmem:[%s9 + $0x38] sm:$0xff]
    %v245 = vld [vmem:[%s9 + $0x40] sm:$0xff]
    %v246 = vld [vmem:[%s9 + $0x48] sm:$0xff]
    %v247 = vld [vmem:[%s9 + $0x50] sm:$0xff]
    %v248 = vld [vmem:[%s9 + $0x58] sm:$0xff]
    %v249 = vld [vmem:[%s9 + $0x60] sm:$0xff]
    %v250 = vld [vmem:[%s9 + $0x68] sm:$0xff]
    %v251 = vld [vmem:[%s9 + $0x70] sm:$0xff]
    %v252 = vld [vmem:[%s9 + $0x78] sm:$0xff]
    %v253 = vld [vmem:[%s9 + $0x80] sm:$0xff]
    %v254 = vld [vmem:[%s9 + $0x88] sm:$0xff]
    %v255 = vld [vmem:[%s9 + $0x90] sm:$0xff]
    %v256 = vld [vmem:[%s9 + $0x98] sm:$0xff]
    %v257 = vld [vmem:[%s9 + $0xa0] sm:$0xff]
    %v258 = vld [vmem:[%s9 + $0xa8] sm:$0xff]
    %v259 = vld [vmem:[%s9 + $0xb0] sm:$0xff]
    %v260 = vld [vmem:[%s9 + $0xb8] sm:$0xff]
    %v261 = vld [vmem:[%s9 + $0xc0] sm:$0xff]
    %v262 = vld [vmem:[%s9 + $0xc8] sm:$0xff]
    %v263 = vld [vmem:[%s9 + $0xd0] sm:$0xff]
    %v264 = vld [vmem:[%s9 + $0xd8] sm:$0xff]
    %v265 = vld [vmem:[%s9 + $0xe0] sm:$0xff]
    %v266 = vld [vmem:[%s9 + $0xe8] sm:$0xff]
    %v267 = vld [vmem:[%s9 + $0xf0] sm:$0xff]
    %v268 = vld [vmem:[%s9 + $0xf8] sm:$0xff]
    %v269 = vld [vmem:[%s9 + $0x100] sm:$0xff]
    %v270 = vld [vmem:[%s9 + $0x108] sm:$0xff]
    %v271 = vld [vmem:[%s9 + $0x110] sm:$0xff]
    %v272 = vld [vmem:[%s9 + $0x118] sm:$0xff]
    %v273 = vld [vmem:[%s9 + $0x120] sm:$0xff]
    %v274 = vld [vmem:[%s9 + $0x128] sm:$0xff]
    %v275 = vld [vmem:[%s9 + $0x130] sm:$0xff]
    %v276 = vld [vmem:[%s9 + $0x138] sm:$0xff]
    %v277 = vld [vmem:[%s9 + $0x140] sm:$0xff]
    %v278 = vld [vmem:[%s9 + $0x148] sm:$0xff]
    %v279 = vld [vmem:[%s9 + $0x150] sm:$0xff]
    %v280 = vld [vmem:[%s9 + $0x158] sm:$0xff]
    %v281 = vld [vmem:[%s9 + $0x160] sm:$0xff]
    %v282 = vld [vmem:[%s9 + $0x168] sm:$0xff]
    %v283 = vld [vmem:[%s9 + $0x170] sm:$0xff]
    %v284 = vld [vmem:[%s9 + $0x178] sm:$0xff]
    %v285 = vld [vmem:[%s9 + $0x180] sm:$0xff]
    %v286 = vld [vmem:[%s9 + $0x188] sm:$0xff]
    %v287 = vld [vmem:[%s9 + $0x190] sm:$0xff]
    %v288 = vld [vmem:[%s9 + $0x198] sm:$0xff]
    %v289 = vld [vmem:[%s9 + $0x1a0] sm:$0xff]
    %v290 = vld [vmem:[%s9 + $0x1a8] sm:$0xff]
    %v291 = vld [vmem:[%s9 + $0x1b0] sm:$0xff]
    %v292 = vld [vmem:[%s9 + $0x1b8] sm:$0xff]
    %v293 = vld [vmem:[%s9 + $0x1c0] sm:$0xff]
    %v294 = vld [vmem:[%s9 + $0x1c8] sm:$0xff]
    %v295 = vld [vmem:[%s9 + $0x1d0] sm:$0xff]
    %v296 = vld [vmem:[%s9 + $0x1d8] sm:$0xff]
    %v297 = vld [vmem:[%s9 + $0x1e0] sm:$0xff]
    %v298 = vld [vmem:[%s9 + $0x1e8] sm:$0xff]
    %v299 = vld [vmem:[%s9 + $0x1f0] sm:$0xff]
    %v300 = vld [vmem:[%s9 + $0x1f8] sm:$0xff]
    %v301 = vld [vmem:[%s10] sm:$0x3]
    %v303 = vperm.slane %v301, 0
    %v304 = vperm.slane %v301, 1
    %307 = vmatpush.msra.mxu0 %v267
    %308 = vmatpush.msra.mxu0 %v265
    %309 = vmatpush.msra.mxu0 %v263
    %310 = vmatpush.msra.mxu0 %v261
    %311 = vmatpush.msra.mxu0 %v259
    %312 = vmatpush.msra.mxu0 %v257
    %313 = vmatpush.msra.mxu0 %v255
    %314 = vmatpush.msra.mxu0 %v253
    %315 = vmatpush.msra.mxu0 %v251
    %316 = vmatpush.msra.mxu0 %v249
    %317 = vmatpush.msra.mxu0 %v247
    %318 = vmatpush.msra.mxu0 %v245
    %319 = vmatpush.msra.mxu0 %v243
    %320 = vmatpush.msra.mxu0 %v241
    %321 = vmatpush.msra.mxu0 %v239
    %322 = vmatpush.msra.mxu0 %v237
    %323 = vmatmul.f32.gmra.mxu0 %v235
    %v324 = vpop.f32.mrf.mxu0
    %v325 = vadd.f32 %v303, %v324
    %326 = vdwg.mxu0
    %327 = vmatpush.msra.mxu0 %v299
    %328 = vmatpush.msra.mxu0 %v297
    %329 = vmatpush.msra.mxu0 %v295
    %330 = vmatpush.msra.mxu0 %v293
    %331 = vmatpush.msra.mxu0 %v291
    %332 = vmatpush.msra.mxu0 %v289
    %333 = vmatpush.msra.mxu0 %v287
    %334 = vmatpush.msra.mxu0 %v285
    %335 = vmatpush.msra.mxu0 %v283
    %336 = vmatpush.msra.mxu0 %v281
    %337 = vmatpush.msra.mxu0 %v279
    %338 = vmatpush.msra.mxu0 %v277
    %339 = vmatpush.msra.mxu0 %v275
    %340 = vmatpush.msra.mxu0 %v273
    %341 = vmatpush.msra.mxu0 %v271
    %342 = vmatpush.msra.mxu0 %v269
    %343 = vmatmul.f32.gmra.mxu0 %v236
    %v344 = vpop.f32.mrf.mxu0
    %v345 = vadd.f32 %v325, %v344
    %346 = vdwg.mxu0
    %347 = vmatpush.msra.mxu0 %v268
    %348 = vmatpush.msra.mxu0 %v266
    %349 = vmatpush.msra.mxu0 %v264
    %350 = vmatpush.msra.mxu0 %v262
    %351 = vmatpush.msra.mxu0 %v260
    %352 = vmatpush.msra.mxu0 %v258
    %353 = vmatpush.msra.mxu0 %v256
    %354 = vmatpush.msra.mxu0 %v254
    %355 = vmatpush.msra.mxu0 %v252
    %356 = vmatpush.msra.mxu0 %v250
    %357 = vmatpush.msra.mxu0 %v248
    %358 = vmatpush.msra.mxu0 %v246
    %359 = vmatpush.msra.mxu0 %v244
    %360 = vmatpush.msra.mxu0 %v242
    %361 = vmatpush.msra.mxu0 %v240
    %362 = vmatpush.msra.mxu0 %v238
    %363 = vmatmul.f32.gmra.mxu0 %v235
    %v364 = vpop.f32.mrf.mxu0
    %v365 = vadd.f32 %v304, %v364
    %366 = vdwg.mxu0
    %367 = vmatpush.msra.mxu0 %v300
    %368 = vmatpush.msra.mxu0 %v298
    %369 = vmatpush.msra.mxu0 %v296
    %370 = vmatpush.msra.mxu0 %v294
    %371 = vmatpush.msra.mxu0 %v292
    %372 = vmatpush.msra.mxu0 %v290
    %373 = vmatpush.msra.mxu0 %v288
    %374 = vmatpush.msra.mxu0 %v286
    %375 = vmatpush.msra.mxu0 %v284
    %376 = vmatpush.msra.mxu0 %v282
    %377 = vmatpush.msra.mxu0 %v280
    %378 = vmatpush.msra.mxu0 %v278
    %379 = vmatpush.msra.mxu0 %v276
    %380 = vmatpush.msra.mxu0 %v274
    %381 = vmatpush.msra.mxu0 %v272
    %382 = vmatpush.msra.mxu0 %v270
    %383 = vmatmul.f32.gmra.mxu0 %v236
    %v384 = vpop.f32.mrf.mxu0
    %v385 = vadd.f32 %v365, %v384
    %386 = vdwg.mxu0
    %vm387 = vcmp.gt.f32.partialorder %v345, 0.0
    %vm388 = vcmp.gt.f32.partialorder %v385, 0.0
    %v389 = vmul.f32 %v345, 0.1
    %v390 = vmul.f32 %v385, 0.1
    %v391 = vsel %vm387, %v345, %v389
    %v392 = vsel %vm388, %v385, %v390
    %v393 = vld [vmem:[#allocation2] sm:$0xff]
    %v394 = vld [vmem:[#allocation2 + $0x8] sm:$0xff]
    %v395 = vld [vmem:[#allocation2 + $0x10] sm:$0xff]
    %v396 = vld [vmem:[#allocation2 + $0x18] sm:$0xff]
    %v397 = vld [vmem:[#allocation2 + $0x20] sm:$0xff]
    %v398 = vld [vmem:[#allocation2 + $0x28] sm:$0xff]
    %v399 = vld [vmem:[#allocation2 + $0x30] sm:$0xff]
    %v400 = vld [vmem:[#allocation2 + $0x38] sm:$0xff]
    %v401 = vld [vmem:[#allocation2 + $0x40] sm:$0xff]
    %v402 = vld [vmem:[#allocation2 + $0x48] sm:$0xff]
    %v403 = vld [vmem:[#allocation2 + $0x50] sm:$0xff]
    %v404 = vld [vmem:[#allocation2 + $0x58] sm:$0xff]
    %v405 = vld [vmem:[#allocation2 + $0x60] sm:$0xff]
    %v406 = vld [vmem:[#allocation2 + $0x68] sm:$0xff]
    %v407 = vld [vmem:[#allocation2 + $0x70] sm:$0xff]
    %v408 = vld [vmem:[#allocation2 + $0x78] sm:$0xff]
    %v409 = vld [vmem:[#allocation2 + $0x80] sm:$0xff]
    %v410 = vld [vmem:[#allocation2 + $0x88] sm:$0xff]
    %v411 = vld [vmem:[#allocation2 + $0x90] sm:$0xff]
    %v412 = vld [vmem:[#allocation2 + $0x98] sm:$0xff]
    %v413 = vld [vmem:[#allocation2 + $0xa0] sm:$0xff]
    %v414 = vld [vmem:[#allocation2 + $0xa8] sm:$0xff]
    %v415 = vld [vmem:[#allocation2 + $0xb0] sm:$0xff]
    %v416 = vld [vmem:[#allocation2 + $0xb8] sm:$0xff]
    %v417 = vld [vmem:[#allocation2 + $0xc0] sm:$0xff]
    %v418 = vld [vmem:[#allocation2 + $0xc8] sm:$0xff]
    %v419 = vld [vmem:[#allocation2 + $0xd0] sm:$0xff]
    %v420 = vld [vmem:[#allocation2 + $0xd8] sm:$0xff]
    %v421 = vld [vmem:[#allocation2 + $0xe0] sm:$0xff]
    %v422 = vld [vmem:[#allocation2 + $0xe8] sm:$0xff]
    %v423 = vld [vmem:[#allocation2 + $0xf0] sm:$0xff]
    %v424 = vld [vmem:[#allocation2 + $0xf8] sm:$0xff]
    %v425 = vld [vmem:[%s12] sm:$0x1]
    %v427 = vperm.slane %v425, 0
    %429 = vmatpush.msra.mxu0 %v408
    %430 = vmatpush.msra.mxu0 %v407
    %431 = vmatpush.msra.mxu0 %v406
    %432 = vmatpush.msra.mxu0 %v405
    %433 = vmatpush.msra.mxu0 %v404
    %434 = vmatpush.msra.mxu0 %v403
    %435 = vmatpush.msra.mxu0 %v402
    %436 = vmatpush.msra.mxu0 %v401
    %437 = vmatpush.msra.mxu0 %v400
    %438 = vmatpush.msra.mxu0 %v399
    %439 = vmatpush.msra.mxu0 %v398
    %440 = vmatpush.msra.mxu0 %v397
    %441 = vmatpush.msra.mxu0 %v396
    %442 = vmatpush.msra.mxu0 %v395
    %443 = vmatpush.msra.mxu0 %v394
    %444 = vmatpush.msra.mxu0 %v393
    %445 = vmatmul.f32.gmra.mxu0 %v391
    %v446 = vpop.f32.mrf.mxu0
    %v447 = vadd.f32 %v427, %v446
    %448 = vdwg.mxu0
    %449 = vmatpush.msra.mxu0 %v424
    %450 = vmatpush.msra.mxu0 %v423
    %451 = vmatpush.msra.mxu0 %v422
    %452 = vmatpush.msra.mxu0 %v421
    %453 = vmatpush.msra.mxu0 %v420
    %454 = vmatpush.msra.mxu0 %v419
    %455 = vmatpush.msra.mxu0 %v418
    %456 = vmatpush.msra.mxu0 %v417
    %457 = vmatpush.msra.mxu0 %v416
    %458 = vmatpush.msra.mxu0 %v415
    %459 = vmatpush.msra.mxu0 %v414
    %460 = vmatpush.msra.mxu0 %v413
    %461 = vmatpush.msra.mxu0 %v412
    %462 = vmatpush.msra.mxu0 %v411
    %463 = vmatpush.msra.mxu0 %v410
    %464 = vmatpush.msra.mxu0 %v409
    %465 = vmatmul.f32.gmra.mxu0 %v392
    %v466 = vpop.f32.mrf.mxu0
    %v467 = vadd.f32 %v447, %v466
    %468 = vdwg.mxu0
    %vm469 = vcmp.gt.f32.partialorder %v467, 0.0
    %v470 = vmul.f32 %v467, 0.1
    %v471 = vsel %vm469, %v467, %v470
    %v472 = vld [vmem:[%s13] sm:$0xff]
    %v473 = vld [vmem:[%s13 + $0x8] sm:$0xff]
    %v474 = vld [vmem:[%s13 + $0x10] sm:$0xff]
    %v475 = vld [vmem:[%s13 + $0x18] sm:$0xff]
    %v476 = vld [vmem:[%s13 + $0x20] sm:$0xff]
    %v477 = vld [vmem:[%s13 + $0x28] sm:$0xff]
    %v478 = vld [vmem:[%s13 + $0x30] sm:$0xff]
    %v479 = vld [vmem:[%s13 + $0x38] sm:$0xff]
    %v480 = vld [vmem:[%s13 + $0x40] sm:$0xff]
    %v481 = vld [vmem:[%s13 + $0x48] sm:$0xff]
    %v482 = vld [vmem:[%s13 + $0x50] sm:$0xff]
    %v483 = vld [vmem:[%s13 + $0x58] sm:$0xff]
    %v484 = vld [vmem:[%s13 + $0x60] sm:$0xff]
    %v485 = vld [vmem:[%s13 + $0x68] sm:$0xff]
    %v486 = vld [vmem:[%s13 + $0x70] sm:$0xff]
    %v487 = vld [vmem:[%s13 + $0x78] sm:$0xff]
    %v488 = vld [vmem:[%s14] sm:$0x1]
    %v490 = vperm.slane %v488, 0
    %492 = vmatpush.msra.mxu0 %v487
    %493 = vmatpush.msra.mxu0 %v486
    %494 = vmatpush.msra.mxu0 %v485
    %495 = vmatpush.msra.mxu0 %v484
    %496 = vmatpush.msra.mxu0 %v483
    %497 = vmatpush.msra.mxu0 %v482
    %498 = vmatpush.msra.mxu0 %v481
    %499 = vmatpush.msra.mxu0 %v480
    %500 = vmatpush.msra.mxu0 %v479
    %501 = vmatpush.msra.mxu0 %v478
    %502 = vmatpush.msra.mxu0 %v477
    %503 = vmatpush.msra.mxu0 %v476
    %504 = vmatpush.msra.mxu0 %v475
    %505 = vmatpush.msra.mxu0 %v474
    %506 = vmatpush.msra.mxu0 %v473
    %507 = vmatpush.msra.mxu0 %v472
    %508 = vmatmul.f32.gmra.mxu0 %v471
    %v509 = vpop.f32.mrf.mxu0
    %v510 = vadd.f32 %v490, %v509
    %511 = vdwg.mxu0
    %vm512 = vcmp.gt.f32.partialorder %v510, 0.0
    %v513 = vmul.f32 %v510, 0.1
    %v514 = vsel %vm512, %v510, %v513
    %v515 = vld [vmem:[%s15] sm:$0xff]
    %v516 = vld [vmem:[%s15 + $0x8] sm:$0xff]
    %v517 = vld [vmem:[%s15 + $0x10] sm:$0xff]
    %v518 = vld [vmem:[%s15 + $0x18] sm:$0xff]
    %v519 = vld [vmem:[%s15 + $0x20] sm:$0xff]
    %v520 = vld [vmem:[%s15 + $0x28] sm:$0xff]
    %v521 = vld [vmem:[%s15 + $0x30] sm:$0xff]
    %v522 = vld [vmem:[%s15 + $0x38] sm:$0xff]
    %v523 = vld [vmem:[%s16] sm:$0x1]
    %v525 = vperm.slane %v523, 0
    %vm527 = vcmask 523264
    %v529 = vsel %vm527, %v514, 0
    %531 = vmatpush.msra.mxu0 0.0
    %532 = vmatpush.msra.mxu0 0.0
    %533 = vmatpush.msra.mxu0 0.0
    %534 = vmatpush.msra.mxu0 0.0
    %535 = vmatpush.msra.mxu0 0.0
    %536 = vmatpush.msra.mxu0 0.0
    %537 = vmatpush.msra.mxu0 0.0
    %538 = vmatpush.msra.mxu0 0.0
    %539 = vmatpush.msra.mxu0 %v522
    %540 = vmatpush.msra.mxu0 %v521
    %541 = vmatpush.msra.mxu0 %v520
    %542 = vmatpush.msra.mxu0 %v519
    %543 = vmatpush.msra.mxu0 %v518
    %544 = vmatpush.msra.mxu0 %v517
    %545 = vmatpush.msra.mxu0 %v516
    %546 = vmatpush.msra.mxu0 %v515
    %547 = vmatmul.f32.gmra.mxu0 %v529
    %v548 = vpop.f32.mrf.mxu0
    %v549 = vadd.f32 %v525, %v548
    %550 = vdwg.mxu0
    %551 = vst [vmem:[#allocation5] sm:$0xff] %v549
    // Predicated region
    $region74: #{property_optimization_forward.1} parent=1 // pred_check
      _
    $region75: #{property_optimization_forward.1} parent=1 // pred_check_branch
      %553 = sbr.rel (0) target = $region77
    $region76: #{property_optimization_forward.1} parent=1 // pred_region
      %555 = vsyncadd [#allocation4], 0
      %s557 = sshll.u32 [#allocation5], 4
      %s558 = int_to_ptr.vmem [resolvable:$true] %s557
      %s559 = sshll.u32 %s17, 4
      %s560 = int_to_ptr.hbm [resolvable:$true] %s559
      %562 = dma.vmem_to_hbm [thread:$0]  %s558, 128, %s560, [#allocation4]
    $region77: #{property_optimization_forward.1} parent=1 // pred_fallthru
      _
    // Predicated region
    $region78: #{property_optimization_forward.1} parent=1 // pred_check
      _
    $region79: #{property_optimization_forward.1} parent=1 // pred_check_branch
      %564 = sbr.rel (0) target = $region81
    $region80: #{property_optimization_forward.1} parent=1 // pred_region
      %566 = vsyncadd [#allocation7], 0
      %s568 = sshll.u32 [#allocation6], 4
      %s569 = int_to_ptr.vmem [resolvable:$true] %s568
      %s570 = sshll.u32 %s18, 4
      %s571 = int_to_ptr.hbm [resolvable:$true] %s570
      %573 = dma.vmem_to_hbm [thread:$0]  %s569, 128, %s571, [#allocation7]
    $region81: #{property_optimization_forward.1} parent=1 // pred_fallthru
      _
    // Predicated region
    $region82: #{property_optimization_forward.1} parent=1 // pred_check
      _
    $region83: #{property_optimization_forward.1} parent=1 // pred_check_branch
      %575 = sbr.rel (0) target = $region85
    $region84: #{property_optimization_forward.1} parent=1 // pred_region
      %577 = dma.done [#allocation4], 128
    $region85: #{property_optimization_forward.1} parent=1 // pred_fallthru
      _
    // Predicated region
    $region86: #{property_optimization_forward.1} parent=1 // pred_check
      _
    $region87: #{property_optimization_forward.1} parent=1 // pred_check_branch
      %579 = sbr.rel (0) target = $region89
    $region88: #{property_optimization_forward.1} parent=1 // pred_region
      %581 = dma.done [#allocation7], 128
    $region89: #{property_optimization_forward.1} parent=1 // pred_fallthru
      _
    %582 = vsyncpa [#allocation3], 1
    %583 = vsyncpa [#allocation4], 1
    %584 = vsyncpa [#allocation7], 1

</llo_original>
